<compile_context>
chip_gen: v5e
topology: v5e:2x2
jax: 0.10.0
libtpu: 0.0.40
codegen_flags: <defaults>
</compile_context>

<pallas_src>
import functools
import math

import jax
import jax.numpy as jnp
from jax.experimental import pallas as pl
from jax.experimental.pallas import tpu as pltpu


def _bce_dice_kernel(x_ref, y_ref, out_ref,
                     acc_bce, acc_sig, acc_tgt, acc_int,
                     *, n_valid, batch, smooth):
    k = pl.program_id(0)

    @pl.when(k == 0)
    def _init():
        acc_bce[...] = jnp.zeros_like(acc_bce)
        acc_sig[...] = jnp.zeros_like(acc_sig)
        acc_tgt[...] = jnp.zeros_like(acc_tgt)
        acc_int[...] = jnp.zeros_like(acc_int)

    # Load narrow-dtype tiles and upcast in vregs (HBM traffic stays narrow).
    x = x_ref[...].astype(jnp.float32)
    y = y_ref[...].astype(jnp.float32)

    # Numerically stable BCE-with-logits per element.
    bce_elem = jnp.maximum(x, 0.0) - x * y + jnp.log1p(jnp.exp(-jnp.abs(x)))
    sig = 1.0 / (1.0 + jnp.exp(-x))

    # Positional (lane-parallel) accumulation: pure VALU adds per tile, no
    # per-tile cross-lane reduction.
    acc_bce[...] += bce_elem
    acc_sig[...] += sig
    acc_tgt[...] += y
    acc_int[...] += sig * y

    @pl.when(k == pl.num_programs(0) - 1)
    def _finalize():
        s_bce = jnp.sum(acc_bce[...])                          # scalar
        s_sig = jnp.sum(acc_sig[...], axis=1, keepdims=True)   # (B, 1)
        s_tgt = jnp.sum(acc_tgt[...], axis=1, keepdims=True)   # (B, 1)
        s_int = jnp.sum(acc_int[...], axis=1, keepdims=True)   # (B, 1)

        bce = s_bce / jnp.float32(n_valid)
        dice = (2.0 * s_int + jnp.float32(smooth)) / (s_sig + s_tgt + jnp.float32(smooth))
        dice_loss = 1.0 - jnp.sum(dice) / jnp.float32(batch)
        out_ref[0, 0] = 0.5 * bce + dice_loss


def bce_dice_loss_pallas(logits, targets, smooth=1e-05, lane_tile=2048):
    """NormalBCEDiceLoss forward.

    logits:  (B, *) raw scores (any float dtype; bf16 kept narrow in HBM).
    targets: (B, *) float targets in [0, 1], same shape as logits.
    Returns a scalar float32 loss = 0.5 * BCEWithLogits(mean) + DiceLoss.
    """
    assert logits.shape == targets.shape
    B = logits.shape[0]
    D = int(math.prod(logits.shape[1:]))

    x2d = logits.reshape(B, D)
    y2d = targets.reshape(B, D)

    LANE = 128
    d_r = pl.cdiv(D, LANE) * LANE
    tl = min(int(lane_tile), d_r)
    d_pad = pl.cdiv(d_r, tl) * tl
    if d_pad != D:
        pad = d_pad - D
        # Pad logits with a very negative value: sigmoid -> 0, per-element
        # BCE -> 0 (with target 0), so padded lanes contribute nothing.
        x2d = jnp.pad(x2d, ((0, 0), (0, pad)),
                      constant_values=jnp.asarray(-1e9, dtype=x2d.dtype))
        y2d = jnp.pad(y2d, ((0, 0), (0, pad)),
                      constant_values=jnp.asarray(0, dtype=y2d.dtype))
    num_tiles = d_pad // tl

    kernel = functools.partial(
        _bce_dice_kernel, n_valid=B * D, batch=B, smooth=float(smooth))

    out = pl.pallas_call(
        kernel,
        out_shape=jax.ShapeDtypeStruct((1, 1), jnp.float32),
        grid_spec=pltpu.PrefetchScalarGridSpec(
            num_scalar_prefetch=0,
            grid=(num_tiles,),
            in_specs=[
                pl.BlockSpec((B, tl), lambda k: (0, k)),
                pl.BlockSpec((B, tl), lambda k: (0, k)),
            ],
            out_specs=pl.BlockSpec(memory_space=pltpu.MemorySpace.SMEM),
            scratch_shapes=[pltpu.VMEM((B, tl), jnp.float32)] * 4,
        ),
        compiler_params=pltpu.CompilerParams(
            dimension_semantics=("arbitrary",),
            vmem_limit_bytes=64 * 1024 * 1024,
        ),
    )(x2d, y2d)
    return out[0, 0]


def bce_dice_loss_ref(logits, targets, smooth=1e-05):
    """Pure-JAX reference mirroring the PyTorch NormalBCEDiceLoss forward."""
    x = logits.astype(jnp.float32)
    y = targets.astype(jnp.float32)
    bce = jnp.mean(jnp.maximum(x, 0.0) - x * y + jnp.log1p(jnp.exp(-jnp.abs(x))))
    num = x.shape[0]
    p = jax.nn.sigmoid(x).reshape(num, -1)
    t = y.reshape(num, -1)
    inter = jnp.sum(p * t, axis=1)
    dice = (2.0 * inter + smooth) / (jnp.sum(p, axis=1) + jnp.sum(t, axis=1) + smooth)
    dice_loss = 1.0 - jnp.sum(dice) / num
    return 0.5 * bce + dice_loss


if __name__ == "__main__":
    key = jax.random.PRNGKey(0)
    kx, ky = jax.random.split(key)

    B, C, H, W = 2, 4, 16, 16
    logits = 2.0 * jax.random.normal(kx, (B, C, H, W), dtype=jnp.float32)
    targets = (jax.random.uniform(ky, (B, C, H, W)) > 0.5).astype(jnp.float32)

    loss = bce_dice_loss_pallas(logits, targets)
    jax.block_until_ready(loss)

    ref = bce_dice_loss_ref(logits, targets)
    assert jnp.allclose(loss, ref, rtol=2e-5, atol=1e-5), (loss, ref)

    print("KERNEL_OK")
</pallas_src>

<mosaic_0001>
module attributes {stable_mosaic.version = 11 : i64} {
  func.func @_bce_dice_kernel(%arg0: i32, %arg1: memref<2x1024xf32, #tpu.memory_space<vmem>>, %arg2: memref<2x1024xf32, #tpu.memory_space<vmem>>, %arg3: memref<1x1xf32, #tpu.memory_space<smem>>, %arg4: memref<2x1024xf32, #tpu.memory_space<vmem>>, %arg5: memref<2x1024xf32, #tpu.memory_space<vmem>>, %arg6: memref<2x1024xf32, #tpu.memory_space<vmem>>, %arg7: memref<2x1024xf32, #tpu.memory_space<vmem>>) attributes {dimension_semantics = [#tpu.dimension_semantics<arbitrary>], iteration_bounds = array<i64: 1>, scalar_prefetch = 0 : i64, scratch_operands = 4 : i64, tpu.core_type = #tpu.core_type<tc>, window_params = [{transform_indices = @transform_0, window_bounds = array<i64: 2, 1024>}, {transform_indices = @transform_1, window_bounds = array<i64: 2, 1024>}, {transform_indices = @transform_2, window_bounds = array<i64: 1, 1>}]} {
    %c0_i32 = arith.constant 0 : i32
    %0 = arith.cmpi eq, %arg0, %c0_i32 : i32
    %1 = arith.extui %0 : i1 to i32
    %c0_i32_0 = arith.constant 0 : i32
    %2 = arith.cmpi ne, %1, %c0_i32_0 : i32
    scf.if %2 {
      %cst_26 = arith.constant 0.000000e+00 : f32
      %38 = vector.broadcast %cst_26 : f32 to vector<2x1024xf32>
      %c0_27 = arith.constant 0 : index
      %c0_28 = arith.constant 0 : index
      %39 = vector.load %arg4[%c0_27, %c0_28] : memref<2x1024xf32, #tpu.memory_space<vmem>>, vector<2x1024xf32>
      tpu.vector_store %arg4[%c0_27, %c0_28], %38 {strides = array<i32>} : memref<2x1024xf32, #tpu.memory_space<vmem>>, vector<2x1024xf32>,
      %cst_29 = arith.constant 0.000000e+00 : f32
      %40 = vector.broadcast %cst_29 : f32 to vector<2x1024xf32>
      %c0_30 = arith.constant 0 : index
      %c0_31 = arith.constant 0 : index
      %41 = vector.load %arg5[%c0_30, %c0_31] : memref<2x1024xf32, #tpu.memory_space<vmem>>, vector<2x1024xf32>
      tpu.vector_store %arg5[%c0_30, %c0_31], %40 {strides = array<i32>} : memref<2x1024xf32, #tpu.memory_space<vmem>>, vector<2x1024xf32>,
      %cst_32 = arith.constant 0.000000e+00 : f32
      %42 = vector.broadcast %cst_32 : f32 to vector<2x1024xf32>
      %c0_33 = arith.constant 0 : index
      %c0_34 = arith.constant 0 : index
      %43 = vector.load %arg6[%c0_33, %c0_34] : memref<2x1024xf32, #tpu.memory_space<vmem>>, vector<2x1024xf32>
      tpu.vector_store %arg6[%c0_33, %c0_34], %42 {strides = array<i32>} : memref<2x1024xf32, #tpu.memory_space<vmem>>, vector<2x1024xf32>,
      %cst_35 = arith.constant 0.000000e+00 : f32
      %44 = vector.broadcast %cst_35 : f32 to vector<2x1024xf32>
      %c0_36 = arith.constant 0 : index
      %c0_37 = arith.constant 0 : index
      %45 = vector.load %arg7[%c0_36, %c0_37] : memref<2x1024xf32, #tpu.memory_space<vmem>>, vector<2x1024xf32>
      tpu.vector_store %arg7[%c0_36, %c0_37], %44 {strides = array<i32>} : memref<2x1024xf32, #tpu.memory_space<vmem>>, vector<2x1024xf32>,
    } else {
    }
    %c0 = arith.constant 0 : index
    %c0_1 = arith.constant 0 : index
    %3 = vector.load %arg1[%c0, %c0_1] : memref<2x1024xf32, #tpu.memory_space<vmem>>, vector<2x1024xf32>
    %c0_2 = arith.constant 0 : index
    %c0_3 = arith.constant 0 : index
    %4 = vector.load %arg2[%c0_2, %c0_3] : memref<2x1024xf32, #tpu.memory_space<vmem>>, vector<2x1024xf32>
    %cst = arith.constant 0.000000e+00 : f32
    %5 = vector.broadcast %cst : f32 to vector<2x1024xf32>
    %6 = arith.maximumf %3, %5 : vector<2x1024xf32>
    %7 = arith.mulf %3, %4 : vector<2x1024xf32>
    %8 = arith.subf %6, %7 : vector<2x1024xf32>
    %9 = math.absf %3 : vector<2x1024xf32>
    %cst_4 = arith.constant 0.000000e+00 : f32
    %10 = vector.broadcast %cst_4 : f32 to vector<2x1024xf32>
    %11 = arith.subf %10, %9 : vector<2x1024xf32>
    %12 = math.exp %11 : vector<2x1024xf32>
    %13 = math.log1p %12 : vector<2x1024xf32>
    %14 = arith.addf %8, %13 : vector<2x1024xf32>
    %cst_5 = arith.constant 0.000000e+00 : f32
    %15 = vector.broadcast %cst_5 : f32 to vector<2x1024xf32>
    %16 = arith.subf %15, %3 : vector<2x1024xf32>
    %17 = math.exp %16 : vector<2x1024xf32>
    %cst_6 = arith.constant 1.000000e+00 : f32
    %18 = vector.broadcast %cst_6 : f32 to vector<2x1024xf32>
    %19 = arith.addf %18, %17 : vector<2x1024xf32>
    %cst_7 = arith.constant 1.000000e+00 : f32
    %20 = vector.broadcast %cst_7 : f32 to vector<2x1024xf32>
    %21 = arith.divf %20, %19 : vector<2x1024xf32>
    %c0_8 = arith.constant 0 : index
    %c0_9 = arith.constant 0 : index
    %22 = vector.load %arg4[%c0_8, %c0_9] : memref<2x1024xf32, #tpu.memory_space<vmem>>, vector<2x1024xf32>
    %23 = arith.addf %22, %14 : vector<2x1024xf32>
    %c0_10 = arith.constant 0 : index
    %c0_11 = arith.constant 0 : index
    %24 = vector.load %arg4[%c0_10, %c0_11] : memref<2x1024xf32, #tpu.memory_space<vmem>>, vector<2x1024xf32>
    tpu.vector_store %arg4[%c0_10, %c0_11], %23 {strides = array<i32>} : memref<2x1024xf32, #tpu.memory_space<vmem>>, vector<2x1024xf32>,
    %c0_12 = arith.constant 0 : index
    %c0_13 = arith.constant 0 : index
    %25 = vector.load %arg5[%c0_12, %c0_13] : memref<2x1024xf32, #tpu.memory_space<vmem>>, vector<2x1024xf32>
    %26 = arith.addf %25, %21 : vector<2x1024xf32>
    %c0_14 = arith.constant 0 : index
    %c0_15 = arith.constant 0 : index
    %27 = vector.load %arg5[%c0_14, %c0_15] : memref<2x1024xf32, #tpu.memory_space<vmem>>, vector<2x1024xf32>
    tpu.vector_store %arg5[%c0_14, %c0_15], %26 {strides = array<i32>} : memref<2x1024xf32, #tpu.memory_space<vmem>>, vector<2x1024xf32>,
    %c0_16 = arith.constant 0 : index
    %c0_17 = arith.constant 0 : index
    %28 = vector.load %arg6[%c0_16, %c0_17] : memref<2x1024xf32, #tpu.memory_space<vmem>>, vector<2x1024xf32>
    %29 = arith.addf %28, %4 : vector<2x1024xf32>
    %c0_18 = arith.constant 0 : index
    %c0_19 = arith.constant 0 : index
    %30 = vector.load %arg6[%c0_18, %c0_19] : memref<2x1024xf32, #tpu.memory_space<vmem>>, vector<2x1024xf32>
    tpu.vector_store %arg6[%c0_18, %c0_19], %29 {strides = array<i32>} : memref<2x1024xf32, #tpu.memory_space<vmem>>, vector<2x1024xf32>,
    %c0_20 = arith.constant 0 : index
    %c0_21 = arith.constant 0 : index
    %31 = vector.load %arg7[%c0_20, %c0_21] : memref<2x1024xf32, #tpu.memory_space<vmem>>, vector<2x1024xf32>
    %32 = arith.mulf %21, %4 : vector<2x1024xf32>
    %33 = arith.addf %31, %32 : vector<2x1024xf32>
    %c0_22 = arith.constant 0 : index
    %c0_23 = arith.constant 0 : index
    %34 = vector.load %arg7[%c0_22, %c0_23] : memref<2x1024xf32, #tpu.memory_space<vmem>>, vector<2x1024xf32>
    tpu.vector_store %arg7[%c0_22, %c0_23], %33 {strides = array<i32>} : memref<2x1024xf32, #tpu.memory_space<vmem>>, vector<2x1024xf32>,
    %c0_i32_24 = arith.constant 0 : i32
    %35 = arith.cmpi eq, %arg0, %c0_i32_24 : i32
    %36 = arith.extui %35 : i1 to i32
    %c0_i32_25 = arith.constant 0 : i32
    %37 = arith.cmpi ne, %36, %c0_i32_25 : i32
    scf.if %37 {
      %c0_26 = arith.constant 0 : index
      %c0_27 = arith.constant 0 : index
      %38 = vector.load %arg4[%c0_26, %c0_27] : memref<2x1024xf32, #tpu.memory_space<vmem>>, vector<2x1024xf32>
      %39 = vector.shape_cast %38 : vector<2x1024xf32> to vector<1x2x1024xf32>
      %cst_28 = arith.constant dense<0.000000e+00> : vector<1xf32>
      %40 = vector.multi_reduction <add>, %39, %cst_28 [1, 2] : vector<1x2x1024xf32> to vector<1xf32>
      %41 = vector.shape_cast %40 : vector<1xf32> to vector<1x1x1xf32>
      %42 = vector.extract %41[0, 0, 0] : f32 from vector<1x1x1xf32>
      %c0_29 = arith.constant 0 : index
      %c0_30 = arith.constant 0 : index
      %43 = vector.load %arg5[%c0_29, %c0_30] : memref<2x1024xf32, #tpu.memory_space<vmem>>, vector<2x1024xf32>
      %cst_31 = arith.constant dense<0.000000e+00> : vector<2xf32>
      %44 = vector.multi_reduction <add>, %43, %cst_31 [1] : vector<2x1024xf32> to vector<2xf32>
      %45 = vector.shape_cast %44 : vector<2xf32> to vector<2x1xf32>
      %c0_32 = arith.constant 0 : index
      %c0_33 = arith.constant 0 : index
      %46 = vector.load %arg6[%c0_32, %c0_33] : memref<2x1024xf32, #tpu.memory_space<vmem>>, vector<2x1024xf32>
      %cst_34 = arith.constant dense<0.000000e+00> : vector<2xf32>
      %47 = vector.multi_reduction <add>, %46, %cst_34 [1] : vector<2x1024xf32> to vector<2xf32>
      %48 = vector.shape_cast %47 : vector<2xf32> to vector<2x1xf32>
      %c0_35 = arith.constant 0 : index
      %c0_36 = arith.constant 0 : index
      %49 = vector.load %arg7[%c0_35, %c0_36] : memref<2x1024xf32, #tpu.memory_space<vmem>>, vector<2x1024xf32>
      %cst_37 = arith.constant dense<0.000000e+00> : vector<2xf32>
      %50 = vector.multi_reduction <add>, %49, %cst_37 [1] : vector<2x1024xf32> to vector<2xf32>
      %51 = vector.shape_cast %50 : vector<2xf32> to vector<2x1xf32>
      %cst_38 = arith.constant 2.048000e+03 : f32
      %52 = arith.divf %42, %cst_38 : f32
      %cst_39 = arith.constant 2.000000e+00 : f32
      %53 = vector.broadcast %cst_39 : f32 to vector<2x1xf32>
      %54 = arith.mulf %53, %51 : vector<2x1xf32>
      %cst_40 = arith.constant 9.99999974E-6 : f32
      %55 = vector.broadcast %cst_40 : f32 to vector<2x1xf32>
      %56 = arith.addf %54, %55 : vector<2x1xf32>
      %57 = arith.addf %45, %48 : vector<2x1xf32>
      %cst_41 = arith.constant 9.99999974E-6 : f32
      %58 = vector.broadcast %cst_41 : f32 to vector<2x1xf32>
      %59 = arith.addf %57, %58 : vector<2x1xf32>
      %60 = arith.divf %56, %59 : vector<2x1xf32>
      %61 = vector.shape_cast %60 : vector<2x1xf32> to vector<1x2x1xf32>
      %cst_42 = arith.constant dense<0.000000e+00> : vector<1xf32>
      %62 = vector.multi_reduction <add>, %61, %cst_42 [1, 2] : vector<1x2x1xf32> to vector<1xf32>
      %63 = vector.shape_cast %62 : vector<1xf32> to vector<1x1x1xf32>
      %64 = vector.extract %63[0, 0, 0] : f32 from vector<1x1x1xf32>
      %cst_43 = arith.constant 2.000000e+00 : f32
      %65 = arith.divf %64, %cst_43 : f32
      %cst_44 = arith.constant 1.000000e+00 : f32
      %66 = arith.subf %cst_44, %65 : f32
      %cst_45 = arith.constant 5.000000e-01 : f32
      %67 = arith.mulf %cst_45, %52 : f32
      %68 = arith.addf %67, %66 : f32
      %c0_46 = arith.constant 0 : index
      %c0_47 = arith.constant 0 : index
      %69 = memref.load %arg3[%c0_46, %c0_47] : memref<1x1xf32, #tpu.memory_space<smem>>
      memref.store %68, %arg3[%c0_46, %c0_47] : memref<1x1xf32, #tpu.memory_space<smem>>
    } else {
    }
    return
  }
  func.func @transform_0(%arg0: i32) -> (i32, i32) {
    %c0_i32 = arith.constant 0 : i32
    %c0_i32_0 = arith.constant 0 : i32
    return %c0_i32, %arg0 : i32, i32
  }
  func.func @transform_1(%arg0: i32) -> (i32, i32) {
    %c0_i32 = arith.constant 0 : i32
    %c0_i32_0 = arith.constant 0 : i32
    return %c0_i32, %arg0 : i32, i32
  }
  func.func @transform_2(%arg0: i32) -> (i32, i32) {
    %c0_i32 = arith.constant 0 : i32
    %c0_i32_0 = arith.constant 0 : i32
    %c0_i32_1 = arith.constant 0 : i32
    return %c0_i32, %c0_i32_0 : i32, i32
  }
}

</mosaic_0001>

<llo_original>
// kernel: tpu_custom_call.1
$region0: #{tpu_custom_call.1}
  #allocation0 [shape = 'u32[]', space=smem, size = 0x4, offset = 0x4, fixed_abs, tag = 'smem constant byte address 0x4 - core index']
  #allocation1 [shape = 'u32[72,128]{1,0:T(1,128)}', space=vmem, size = 0x9000, scoped, tag = 'internal scratch']
  #allocation2 [shape = 'f32[2,1024]{1,0:T(2,128)}', space=vmem, size = 0x2000, scoped, tag = 'scratch operand']
  #allocation3 [shape = 'f32[2,1024]{1,0:T(2,128)}', space=vmem, size = 0x2000, scoped, tag = 'scratch operand']
  #allocation4 [shape = 'f32[2,1024]{1,0:T(2,128)}', space=vmem, size = 0x2000, scoped, tag = 'scratch operand']
  #allocation5 [shape = 'f32[2,1024]{1,0:T(2,128)}', space=vmem, size = 0x2000, scoped, tag = 'scratch operand']
  %s0 = inlined_call_operand.hbm [shape: f32[2,1024], index: 0, kind: input, shape index: {}]
  %s1 = inlined_call_operand.hbm [shape: f32[2,1024], index: 1, kind: input, shape index: {}]
  %s2 = inlined_call_operand.hbm [shape: f32[1,1], index: 2, kind: output, shape index: {}]
  %s3 = sld [smem:[#allocation0]]
  $region34: #{tpu_custom_call.1} parent=0
    _
  %s5 = ssub.s32 1, %s3
  %s6 = scalar_select 0, %s5, %s3
  $region1: #{tpu_custom_call.1} parent=0
    #allocation6 [shape = 'u8[8192]{0}', space=vmem, size = 0x2000, scoped, tag = 'input window, operand 0, single buffered']
    #allocation7 [shape = 's32[1]{0}', space=sflag, size = 0x4, scoped, tag = 'scoped memory for tpu_custom_call.1']
    #allocation8 [shape = 's32[1]{0}', space=sflag, size = 0x4, scoped, tag = 'scoped memory for tpu_custom_call.1']
    #allocation9 [shape = 'u8[8192]{0}', space=vmem, size = 0x2000, scoped, tag = 'input window, operand 1, single buffered']
    #allocation10 [shape = 's32[1]{0}', space=sflag, size = 0x4, scoped, tag = 'scoped memory for tpu_custom_call.1']
    #allocation11 [shape = 'u8[512]{0}', space=smem, size = 0x200, scoped, tag = 'output window, operand 0, single buffered']
    %7 = vsyncpa [#allocation7], 0
    %8 = vsyncpa [#allocation10], 0
    %9 = vsyncpa [#allocation8], 0
    // Predicated region
    $region2: #{tpu_custom_call.1} parent=1 // pred_check
      _
    $region3: #{tpu_custom_call.1} parent=1 // pred_check_branch
      %11 = sbr.rel (0) target = $region5
    $region4: #{tpu_custom_call.1} parent=1 // pred_region
      %13 = vsyncadd [#allocation7], 0
      %s15 = sshll.u32 %s0, 4
      %s16 = int_to_ptr.hbm [resolvable:$true] %s15
      %s17 = sshll.u32 [#allocation6], 4
      %s18 = int_to_ptr.vmem [resolvable:$true] %s17
      %20 = dma.hbm_to_vmem [thread:$0]  %s16, 256, %s18, [#allocation7]
    $region5: #{tpu_custom_call.1} parent=1 // pred_fallthru
      _
    // Predicated region
    $region6: #{tpu_custom_call.1} parent=1 // pred_check
      _
    $region7: #{tpu_custom_call.1} parent=1 // pred_check_branch
      %22 = sbr.rel (0) target = $region9
    $region8: #{tpu_custom_call.1} parent=1 // pred_region
      %24 = vsyncadd [#allocation10], 0
      %s26 = sshll.u32 %s1, 4
      %s27 = int_to_ptr.hbm [resolvable:$true] %s26
      %s28 = sshll.u32 [#allocation9], 4
      %s29 = int_to_ptr.vmem [resolvable:$true] %s28
      %31 = dma.hbm_to_vmem [thread:$0]  %s27, 256, %s29, [#allocation10]
    $region9: #{tpu_custom_call.1} parent=1 // pred_fallthru
      _
    // Predicated region
    $region10: #{tpu_custom_call.1} parent=1 // pred_check
      _
    $region11: #{tpu_custom_call.1} parent=1 // pred_check_branch
      %33 = sbr.rel (0) target = $region13
    $region12: #{tpu_custom_call.1} parent=1 // pred_region
      %35 = dma.done [#allocation7], 256
    $region13: #{tpu_custom_call.1} parent=1 // pred_fallthru
      _
    // Predicated region
    $region14: #{tpu_custom_call.1} parent=1 // pred_check
      _
    $region15: #{tpu_custom_call.1} parent=1 // pred_check_branch
      %37 = sbr.rel (0) target = $region17
    $region16: #{tpu_custom_call.1} parent=1 // pred_region
      %39 = dma.done [#allocation10], 256
    $region17: #{tpu_custom_call.1} parent=1 // pred_fallthru
      _
    %p40 = scmp.eq.s32.totalorder 0, 0
    // Predicated region
    $region18: #{tpu_custom_call.1} parent=1 // pred_check
      %p41 = pneg %p40
    $region19: #{tpu_custom_call.1} parent=1 // pred_check_branch
      %43 = sbr.rel (%p41) target = $region21
    $region20: #{tpu_custom_call.1} parent=1 // pred_region
      %44 = vst [vmem:[#allocation2] sm:$0xff] 0.0
      %45 = vst [vmem:[#allocation2 + $0x8] sm:$0xff] 0.0
      %46 = vst [vmem:[#allocation3] sm:$0xff] 0.0
      %47 = vst [vmem:[#allocation3 + $0x8] sm:$0xff] 0.0
      %48 = vst [vmem:[#allocation4] sm:$0xff] 0.0
      %49 = vst [vmem:[#allocation4 + $0x8] sm:$0xff] 0.0
      %50 = vst [vmem:[#allocation5] sm:$0xff] 0.0
      %51 = vst [vmem:[#allocation5 + $0x8] sm:$0xff] 0.0
    $region21: #{tpu_custom_call.1} parent=1 // pred_fallthru
      _
    %v52 = vld [vmem:[#allocation6] sm:$0xff]
    %v53 = vld [vmem:[#allocation6 + $0x8] sm:$0xff]
    %v54 = vld [vmem:[#allocation9] sm:$0xff]
    %v55 = vld [vmem:[#allocation9 + $0x8] sm:$0xff]
    %v56 = vmax.f32 %v52, 0.0
    %v57 = vmax.f32 %v53, 0.0
    %v58 = vmul.f32 %v52, %v54
    %v59 = vmul.f32 %v53, %v55
    %v60 = vsub.f32 %v56, %v58
    %v61 = vsub.f32 %v57, %v59
    %v62 = vand.u32 2147483647, %v52
    %v63 = vand.u32 2147483647, %v53
    %v64 = vsub.f32 0.0, %v62
    %v65 = vsub.f32 0.0, %v63
    %v66 = vmul.f32 %v64, 1.442695
    %v67 = vpow.pop %v66
    %v68 = vmul.f32 %v65, 1.442695
    %v69 = vpow.pop %v68
    %v70 = vadd.f32 %v67, 1.0
    %v71 = vlog2.pop %v70
    %v72 = vmul.f32 %v71, 0.6931472
    %v73 = vmul.f32 -0.5, %v67
    %v74 = vadd.f32 %v73, 1.0
    %v75 = vmul.f32 %v74, %v67
    %v76 = vand.u32 2147483647, %v67
    %vm77 = vcmp.lt.f32.partialorder %v76, 0.0004427343
    %v78 = vsel %vm77, %v75, %v72
    %v79 = vadd.f32 %v69, 1.0
    %v80 = vlog2.pop %v79
    %v81 = vmul.f32 %v80, 0.6931472
    %v82 = vmul.f32 -0.5, %v69
    %v83 = vadd.f32 %v82, 1.0
    %v84 = vmul.f32 %v83, %v69
    %v85 = vand.u32 2147483647, %v69
    %vm86 = vcmp.lt.f32.partialorder %v85, 0.0004427343
    %v87 = vsel %vm86, %v84, %v81
    %v88 = vadd.f32 %v60, %v78
    %v89 = vadd.f32 %v61, %v87
    %v90 = vsub.f32 0.0, %v52
    %v91 = vsub.f32 0.0, %v53
    %v92 = vmul.f32 %v90, 1.442695
    %v93 = vpow.pop %v92
    %v94 = vmul.f32 %v91, 1.442695
    %v95 = vpow.pop %v94
    %v96 = vadd.f32 %v93, 1.0
    %v97 = vadd.f32 %v95, 1.0
    %v98 = vrcp.pop %v96
    %v99 = vmul.f32 %v96, %v98
    %v100 = vsub.f32 1.0, %v99
    %v101 = vmul.f32 %v98, %v100
    %v102 = vadd.f32 %v98, %v101
    %vm103 = vweird.f32 %v96
    %vm104 = vweird.f32 %v98
    %vm105 = vmor %vm103, %vm104
    %v106 = vsel %vm105, %v98, %v102
    %v107 = vand.u32 2147483647, %v96
    %vm108 = vcmp.eq.f32.partialorder %v107, 8.507059e+37
    %v109 = vand.u32 %v96, 2147483648
    %v110 = vor.u32 1.1754944e-38, %v109
    %v111 = vsel %vm108, %v110, %v106
    %v112 = vmul.f32 1.0, %v111
    %v113 = vrcp.pop %v97
    %v114 = vmul.f32 %v97, %v113
    %v115 = vsub.f32 1.0, %v114
    %v116 = vmul.f32 %v113, %v115
    %v117 = vadd.f32 %v113, %v116
    %vm118 = vweird.f32 %v97
    %vm119 = vweird.f32 %v113
    %vm120 = vmor %vm118, %vm119
    %v121 = vsel %vm120, %v113, %v117
    %v122 = vand.u32 2147483647, %v97
    %vm123 = vcmp.eq.f32.partialorder %v122, 8.507059e+37
    %v124 = vand.u32 %v97, 2147483648
    %v125 = vor.u32 1.1754944e-38, %v124
    %v126 = vsel %vm123, %v125, %v121
    %v127 = vmul.f32 1.0, %v126
    %v128 = vld [vmem:[#allocation2] sm:$0xff]
    %v129 = vld [vmem:[#allocation2 + $0x8] sm:$0xff]
    %v130 = vadd.f32 %v128, %v88
    %v131 = vadd.f32 %v129, %v89
    %132 = vst [vmem:[#allocation2] sm:$0xff] %v130
    %133 = vst [vmem:[#allocation2 + $0x8] sm:$0xff] %v131
    %v134 = vld [vmem:[#allocation3] sm:$0xff]
    %v135 = vld [vmem:[#allocation3 + $0x8] sm:$0xff]
    %v136 = vadd.f32 %v134, %v112
    %v137 = vadd.f32 %v135, %v127
    %138 = vst [vmem:[#allocation3] sm:$0xff] %v136
    %139 = vst [vmem:[#allocation3 + $0x8] sm:$0xff] %v137
    %v140 = vld [vmem:[#allocation4] sm:$0xff]
    %v141 = vld [vmem:[#allocation4 + $0x8] sm:$0xff]
    %v142 = vadd.f32 %v140, %v54
    %v143 = vadd.f32 %v141, %v55
    %144 = vst [vmem:[#allocation4] sm:$0xff] %v142
    %145 = vst [vmem:[#allocation4 + $0x8] sm:$0xff] %v143
    %v146 = vld [vmem:[#allocation5] sm:$0xff]
    %v147 = vld [vmem:[#allocation5 + $0x8] sm:$0xff]
    %v148 = vmul.f32 %v112, %v54
    %v149 = vmul.f32 %v127, %v55
    %v150 = vadd.f32 %v146, %v148
    %v151 = vadd.f32 %v147, %v149
    %152 = vst [vmem:[#allocation5] sm:$0xff] %v150
    %153 = vst [vmem:[#allocation5 + $0x8] sm:$0xff] %v151
    // Predicated region
    $region22: #{tpu_custom_call.1} parent=1 // pred_check
      %p154 = pneg %p40
    $region23: #{tpu_custom_call.1} parent=1 // pred_check_branch
      %156 = sbr.rel (%p154) target = $region25
    $region24: #{tpu_custom_call.1} parent=1 // pred_region
      %v157 = vld [vmem:[#allocation2] sm:$0xff]
      %v158 = vld [vmem:[#allocation2 + $0x8] sm:$0xff]
      %161 = vst [vmem:[#allocation1] ss:$4 sm:$0xff] %v157
      %s162 = scalar_lea.vmem [#allocation1], 32
      %163 = vst [vmem:[%s162] ss:$4 sm:$0xff] %v158
      %v164 = vld.sshfl [vmem:[#allocation1] sm:$0xff pattern:$0x73625140]
      %v165 = vld.sshfl [vmem:[#allocation1 + $0x8] sm:$0xff pattern:$0x73625140]
      %v166 = vld.sshfl [vmem:[#allocation1 + $0x10] sm:$0xff pattern:$0x73625140]
      %v167 = vld.sshfl [vmem:[#allocation1 + $0x18] sm:$0xff pattern:$0x73625140]
      %v168 = vld.sshfl [vmem:[#allocation1 + $0x20] sm:$0xff pattern:$0x73625140]
      %v169 = vld.sshfl [vmem:[#allocation1 + $0x28] sm:$0xff pattern:$0x73625140]
      %v170 = vld.sshfl [vmem:[#allocation1 + $0x30] sm:$0xff pattern:$0x73625140]
      %v171 = vld.sshfl [vmem:[#allocation1 + $0x38] sm:$0xff pattern:$0x73625140]
      %vm180 = vcmask 1041408
      %v181 = vsel %vm180, %v164, 0.0
      %v182 = vsel %vm180, %v165, 0.0
      %v183 = vadd.f32 %v181, %v182
      %v184 = vsel %vm180, %v166, 0.0
      %v185 = vadd.f32 %v183, %v184
      %v186 = vsel %vm180, %v167, 0.0
      %v187 = vadd.f32 %v185, %v186
      %v188 = vsel %vm180, %v168, 0.0
      %v189 = vadd.f32 %v187, %v188
      %v190 = vsel %vm180, %v169, 0.0
      %v191 = vadd.f32 %v189, %v190
      %v192 = vsel %vm180, %v170, 0.0
      %v193 = vadd.f32 %v191, %v192
      %v194 = vsel %vm180, %v171, 0.0
      %v195 = vadd.f32 %v193, %v194
      %196 = vadd.xlane.f32.xlu0 %v195
      %v197 = vpop.xlane.xlu0 %196
      %v198 = vrot.slane %v197, 4
      %v199 = vadd.f32 %v197, %v198
      %v200 = vrot.slane %v199, 2
      %v201 = vadd.f32 %v199, %v200
      %v202 = vrot.slane %v201, 1
      %v203 = vadd.f32 %v201, %v202
      %s204 = vtos %v203
      %v205 = vld [vmem:[#allocation3] sm:$0xff]
      %v206 = vld [vmem:[#allocation3 + $0x8] sm:$0xff]
      %209 = vst [vmem:[#allocation1] ss:$4 sm:$0xff] %v205
      %s210 = scalar_lea.vmem [#allocation1], 32
      %211 = vst [vmem:[%s210] ss:$4 sm:$0xff] %v206
      %v212 = vld.sshfl [vmem:[#allocation1] sm:$0xff pattern:$0x73625140]
      %v213 = vld.sshfl [vmem:[#allocation1 + $0x8] sm:$0xff pattern:$0x73625140]
      %v214 = vld.sshfl [vmem:[#allocation1 + $0x10] sm:$0xff pattern:$0x73625140]
      %v215 = vld.sshfl [vmem:[#allocation1 + $0x18] sm:$0xff pattern:$0x73625140]
      %v216 = vld.sshfl [vmem:[#allocation1 + $0x20] sm:$0xff pattern:$0x73625140]
      %v217 = vld.sshfl [vmem:[#allocation1 + $0x28] sm:$0xff pattern:$0x73625140]
      %v218 = vld.sshfl [vmem:[#allocation1 + $0x30] sm:$0xff pattern:$0x73625140]
      %v219 = vld.sshfl [vmem:[#allocation1 + $0x38] sm:$0xff pattern:$0x73625140]
      %v228 = vsel %vm180, %v212, 0.0
      %v229 = vsel %vm180, %v213, 0.0
      %v230 = vadd.f32 %v228, %v229
      %v231 = vsel %vm180, %v214, 0.0
      %v232 = vadd.f32 %v230, %v231
      %v233 = vsel %vm180, %v215, 0.0
      %v234 = vadd.f32 %v232, %v233
      %v235 = vsel %vm180, %v216, 0.0
      %v236 = vadd.f32 %v234, %v235
      %v237 = vsel %vm180, %v217, 0.0
      %v238 = vadd.f32 %v236, %v237
      %v239 = vsel %vm180, %v218, 0.0
      %v240 = vadd.f32 %v238, %v239
      %v241 = vsel %vm180, %v219, 0.0
      %v242 = vadd.f32 %v240, %v241
      %243 = vadd.xlane.f32.xlu0 %v242
      %v244 = vpop.xlane.xlu0 %243
      %v245 = vld [vmem:[#allocation4] sm:$0xff]
      %v246 = vld [vmem:[#allocation4 + $0x8] sm:$0xff]
      %249 = vst [vmem:[#allocation1] ss:$4 sm:$0xff] %v245
      %s250 = scalar_lea.vmem [#allocation1], 32
      %251 = vst [vmem:[%s250] ss:$4 sm:$0xff] %v246
      %v252 = vld.sshfl [vmem:[#allocation1] sm:$0xff pattern:$0x73625140]
      %v253 = vld.sshfl [vmem:[#allocation1 + $0x8] sm:$0xff pattern:$0x73625140]
      %v254 = vld.sshfl [vmem:[#allocation1 + $0x10] sm:$0xff pattern:$0x73625140]
      %v255 = vld.sshfl [vmem:[#allocation1 + $0x18] sm:$0xff pattern:$0x73625140]
      %v256 = vld.sshfl [vmem:[#allocation1 + $0x20] sm:$0xff pattern:$0x73625140]
      %v257 = vld.sshfl [vmem:[#allocation1 + $0x28] sm:$0xff pattern:$0x73625140]
      %v258 = vld.sshfl [vmem:[#allocation1 + $0x30] sm:$0xff pattern:$0x73625140]
      %v259 = vld.sshfl [vmem:[#allocation1 + $0x38] sm:$0xff pattern:$0x73625140]
      %v268 = vsel %vm180, %v252, 0.0
      %v269 = vsel %vm180, %v253, 0.0
      %v270 = vadd.f32 %v268, %v269
      %v271 = vsel %vm180, %v254, 0.0
      %v272 = vadd.f32 %v270, %v271
      %v273 = vsel %vm180, %v255, 0.0
      %v274 = vadd.f32 %v272, %v273
      %v275 = vsel %vm180, %v256, 0.0
      %v276 = vadd.f32 %v274, %v275
      %v277 = vsel %vm180, %v257, 0.0
      %v278 = vadd.f32 %v276, %v277
      %v279 = vsel %vm180, %v258, 0.0
      %v280 = vadd.f32 %v278, %v279
      %v281 = vsel %vm180, %v259, 0.0
      %v282 = vadd.f32 %v280, %v281
      %283 = vadd.xlane.f32.xlu0 %v282
      %v284 = vpop.xlane.xlu0 %283
      %v285 = vld [vmem:[#allocation5] sm:$0xff]
      %v286 = vld [vmem:[#allocation5 + $0x8] sm:$0xff]
      %289 = vst [vmem:[#allocation1] ss:$4 sm:$0xff] %v285
      %s290 = scalar_lea.vmem [#allocation1], 32
      %291 = vst [vmem:[%s290] ss:$4 sm:$0xff] %v286
      %v292 = vld.sshfl [vmem:[#allocation1] sm:$0xff pattern:$0x73625140]
      %v293 = vld.sshfl [vmem:[#allocation1 + $0x8] sm:$0xff pattern:$0x73625140]
      %v294 = vld.sshfl [vmem:[#allocation1 + $0x10] sm:$0xff pattern:$0x73625140]
      %v295 = vld.sshfl [vmem:[#allocation1 + $0x18] sm:$0xff pattern:$0x73625140]
      %v296 = vld.sshfl [vmem:[#allocation1 + $0x20] sm:$0xff pattern:$0x73625140]
      %v297 = vld.sshfl [vmem:[#allocation1 + $0x28] sm:$0xff pattern:$0x73625140]
      %v298 = vld.sshfl [vmem:[#allocation1 + $0x30] sm:$0xff pattern:$0x73625140]
      %v299 = vld.sshfl [vmem:[#allocation1 + $0x38] sm:$0xff pattern:$0x73625140]
      %v308 = vsel %vm180, %v292, 0.0
      %v309 = vsel %vm180, %v293, 0.0
      %v310 = vadd.f32 %v308, %v309
      %v311 = vsel %vm180, %v294, 0.0
      %v312 = vadd.f32 %v310, %v311
      %v313 = vsel %vm180, %v295, 0.0
      %v314 = vadd.f32 %v312, %v313
      %v315 = vsel %vm180, %v296, 0.0
      %v316 = vadd.f32 %v314, %v315
      %v317 = vsel %vm180, %v297, 0.0
      %v318 = vadd.f32 %v316, %v317
      %v319 = vsel %vm180, %v298, 0.0
      %v320 = vadd.f32 %v318, %v319
      %v321 = vsel %vm180, %v299, 0.0
      %v322 = vadd.f32 %v320, %v321
      %323 = vadd.xlane.f32.xlu0 %v322
      %v324 = vpop.xlane.xlu0 %323
      %v325 = vrcp.pop 2048.0
      %v326 = vmul.f32 2048.0, %v325
      %v327 = vsub.f32 1.0, %v326
      %v328 = vmul.f32 %v325, %v327
      %v329 = vadd.f32 %v325, %v328
      %vm330 = vweird.f32 %v325
      %v331 = vsel %vm330, %v325, %v329
      %s332 = vtos %v331
      %s333 = smul.f32 %s204, %s332
      %v334 = vmul.f32 %v324, 2.0
      %v335 = vadd.f32 %v334, 1e-05
      %v336 = vadd.f32 %v244, %v284
      %v337 = vadd.f32 %v336, 1e-05
      %v338 = vrcp.pop %v337
      %v339 = vmul.f32 %v337, %v338
      %v340 = vsub.f32 1.0, %v339
      %v341 = vmul.f32 %v338, %v340
      %v342 = vadd.f32 %v338, %v341
      %vm343 = vweird.f32 %v337
      %vm344 = vweird.f32 %v338
      %vm345 = vmor %vm343, %vm344
      %v346 = vsel %vm345, %v338, %v342
      %v347 = vand.u32 2147483647, %v337
      %vm348 = vcmp.eq.f32.partialorder %v347, 8.507059e+37
      %v349 = vand.u32 %v337, 2147483648
      %v350 = vor.u32 1.1754944e-38, %v349
      %v351 = vsel %vm348, %v350, %v346
      %v352 = vmul.f32 %v335, %v351
      %vm353 = vcmask 1024
      %v354 = vsel %vm353, %v352, 0.0
      %355 = vadd.xlane.f32.xlu0 %v354
      %v356 = vpop.xlane.xlu0 %355
      %v357 = vrot.slane %v356, 4
      %v358 = vadd.f32 %v356, %v357
      %v359 = vrot.slane %v358, 2
      %v360 = vadd.f32 %v358, %v359
      %v361 = vrot.slane %v360, 1
      %v362 = vadd.f32 %v360, %v361
      %s363 = vtos %v362
      %v364 = vrcp.pop 2.0
      %v365 = vmul.f32 2.0, %v364
      %v366 = vsub.f32 1.0, %v365
      %v367 = vmul.f32 %v364, %v366
      %v368 = vadd.f32 %v364, %v367
      %vm369 = vweird.f32 %v364
      %v370 = vsel %vm369, %v364, %v368
      %s371 = vtos %v370
      %s372 = smul.f32 %s363, %s371
      %s373 = ssub.f32 1.0, %s372
      %s374 = smul.f32 %s333, 0.5
      %s375 = sadd.f32 %s374, %s373
      %s376 = scalar_lea.smem [#allocation11], 0
      %377 = sst [smem:[%s376]] %s375
    $region25: #{tpu_custom_call.1} parent=1 // pred_fallthru
      _
    // Predicated region
    $region26: #{tpu_custom_call.1} parent=1 // pred_check
      _
    $region27: #{tpu_custom_call.1} parent=1 // pred_check_branch
      %379 = sbr.rel (0) target = $region29
    $region28: #{tpu_custom_call.1} parent=1 // pred_region
      %381 = vsyncadd [#allocation8], 0
      %s383 = sshll.u32 %s2, 4
      %s384 = int_to_ptr.hbm [resolvable:$true] %s383
      %386 = dma.smem_to_hbm [#allocation11], 16, %s384, [#allocation8]
    $region29: #{tpu_custom_call.1} parent=1 // pred_fallthru
      _
    // Predicated region
    $region30: #{tpu_custom_call.1} parent=1 // pred_check
      _
    $region31: #{tpu_custom_call.1} parent=1 // pred_check_branch
      %388 = sbr.rel (0) target = $region33
    $region32: #{tpu_custom_call.1} parent=1 // pred_region
      %390 = dma.done [#allocation8], 16
    $region33: #{tpu_custom_call.1} parent=1 // pred_fallthru
      _
    %391 = sfence
    %392 = vsyncpa [#allocation7], 1
    %393 = vsyncpa [#allocation10], 1
    %394 = vsyncpa [#allocation8], 1

</llo_original>
